<compile_context>
chip_gen: v7x
topology: tpu7x:2x2x1
jax: 0.10.0
libtpu: 0.0.40
codegen_flags: <defaults>
</compile_context>

<pallas_src>
import functools

import numpy as np
import jax
import jax.numpy as jnp
from jax import lax
from jax.experimental import pallas as pl
from jax.experimental.pallas import tpu as pltpu

LEAKY_SLOPE = 0.01  # torch.nn.LeakyReLU default negative_slope


# -----------------------------------------------------------------------------
# Pallas kernel: one batch tile per grid step.
# -----------------------------------------------------------------------------
def label_predictor_kernel(x_ref, w1t_ref, b1_ref, w2_ref, b2_ref, w3_ref,
                           b3_ref, o_ref, *, num_classes, tau):
    C, H1 = w1t_ref.shape
    per_class = H1 // num_classes               # = 10 (EntropyLinear out_features)

    # ---- EntropyLinear concept-attention folded into the layer-1 weight -----
    # Weight-only math (independent of the input tile); recomputed every step so
    # the batch axis can remain "parallel" across TensorCores.
    w1t = w1t_ref[...]                                                   # (C, nc*10)

    r = lax.broadcasted_iota(jnp.int32, (H1, num_classes), 0)
    c = lax.broadcasted_iota(jnp.int32, (H1, num_classes), 1)
    G = ((r >= c * per_class) & (r < (c + 1) * per_class)).astype(jnp.float32)   # (nc*10, nc)
    rT = lax.broadcasted_iota(jnp.int32, (num_classes, H1), 0)
    cT = lax.broadcasted_iota(jnp.int32, (num_classes, H1), 1)
    GT = ((cT >= rT * per_class) & (cT < (rT + 1) * per_class)).astype(jnp.float32)  # (nc, nc*10)

    # gamma^T[i, c] = sum_o |W1[c, o, i]|  (L1 norm over out_features)
    gammaT = jnp.dot(jnp.abs(w1t), G, preferred_element_type=jnp.float32)    # (C, nc)
    g = gammaT / tau
    g = g - jnp.max(g, axis=0, keepdims=True)
    e = jnp.exp(g)
    alphaT = e / jnp.sum(e, axis=0, keepdims=True)       # softmax over concepts per class
    alpha_normT = alphaT / jnp.max(alphaT, axis=0, keepdims=True)            # (C, nc)
    a_exp = jnp.dot(alpha_normT, GT, preferred_element_type=jnp.float32)     # (C, nc*10)
    w_eff = a_exp * w1t                                  # alpha_norm folded into W1

    # ---- batched MLP head: 3 lane-dense MXU matmuls, M = batch tile ----------
    x = x_ref[...]                                                           # (B, C)
    h = jnp.dot(x, w_eff, preferred_element_type=jnp.float32) + b1_ref[...]  # (B, nc*10)
    h = jnp.where(h > 0, h, LEAKY_SLOPE * h)
    h = jnp.dot(h, w2_ref[...], preferred_element_type=jnp.float32) + b2_ref[...]  # (B, nc*4)
    h = jnp.where(h > 0, h, LEAKY_SLOPE * h)
    out = jnp.dot(h, w3_ref[...], preferred_element_type=jnp.float32) + b3_ref[...]  # (B, nc)
    o_ref[...] = out


# -----------------------------------------------------------------------------
# Glue: weight layout plumbing + pallas_call wrapper.
# -----------------------------------------------------------------------------
def _round_up(v, m):
    return (v + m - 1) // m * m


def label_predictor_forward(x, params, *, num_classes, temperature, block_b=256):
    """x: (N, concept_size) f32  ->  (N, num_classes) f32."""
    N, C = x.shape
    nc = num_classes
    H1, H2, H3 = nc * 10, nc * 4, nc

    # Layout plumbing only (no math): EntropyLinear weight -> (C, nc*10), shared
    # Linear(10,4)/Linear(4,1) -> block-diagonal so the per-class map is one matmul.
    w1t = jnp.transpose(params["w1"], (2, 0, 1)).reshape(C, H1)          # (C, nc*10)
    b1 = params["b1"].reshape(1, H1)
    w2bd = jnp.kron(jnp.eye(nc, dtype=jnp.float32), params["w2"].T)      # (nc*10, nc*4)
    b2 = jnp.tile(params["b2"], nc).reshape(1, H2)
    w3bd = jnp.kron(jnp.eye(nc, dtype=jnp.float32), params["w3"].T)      # (nc*4, nc)
    b3 = jnp.tile(params["b3"], nc).reshape(1, H3)

    # Batch tile: multiple of 8 sublanes; >= 128/256 fills the MXU M dim when N is large.
    B = min(_round_up(N, 8), _round_up(block_b, 8))
    N_pad = _round_up(N, B)
    xp = jnp.pad(x, ((0, N_pad - N), (0, 0))) if N_pad != N else x

    kernel = functools.partial(label_predictor_kernel,
                               num_classes=nc, tau=float(temperature))

    out = pl.pallas_call(
        kernel,
        out_shape=jax.ShapeDtypeStruct((N_pad, H3), jnp.float32),
        grid=(N_pad // B,),
        in_specs=[
            pl.BlockSpec((B, C), lambda n: (n, 0)),       # x batch tile
            pl.BlockSpec((C, H1), lambda n: (0, 0)),      # EntropyLinear weight (raw, transposed)
            pl.BlockSpec((1, H1), lambda n: (0, 0)),      # EntropyLinear bias
            pl.BlockSpec((H1, H2), lambda n: (0, 0)),     # block-diag Linear(10,4)
            pl.BlockSpec((1, H2), lambda n: (0, 0)),
            pl.BlockSpec((H2, H3), lambda n: (0, 0)),     # block-diag Linear(4,1)
            pl.BlockSpec((1, H3), lambda n: (0, 0)),
        ],
        out_specs=pl.BlockSpec((B, H3), lambda n: (n, 0)),
        compiler_params=pltpu.CompilerParams(
            dimension_semantics=("parallel",)),           # independent batch tiles
    )(xp, w1t, b1, w2bd, b2, w3bd, b3)
    return out[:N]


# -----------------------------------------------------------------------------
# Deterministic parameter init (PyTorch-style uniform fan-in bounds).
# -----------------------------------------------------------------------------
def init_params(key, concept_size, num_classes):
    ks = jax.random.split(key, 6)

    def u(k, shape, fan_in):
        b = 1.0 / np.sqrt(fan_in)
        return jax.random.uniform(k, shape, jnp.float32, -b, b)

    return dict(
        w1=u(ks[0], (num_classes, 10, concept_size), concept_size),   # EntropyLinear.weight
        b1=u(ks[1], (num_classes, 1, 10), concept_size),              # EntropyLinear.bias
        w2=u(ks[2], (4, 10), 10),                                     # Linear(10, 4)
        b2=u(ks[3], (4,), 10),
        w3=u(ks[4], (1, 4), 4),                                       # Linear(4, 1)
        b3=u(ks[5], (1,), 4),
    )


# -----------------------------------------------------------------------------
# Pure-JAX reference (mirrors the PyTorch forward exactly) for validation.
# -----------------------------------------------------------------------------
def reference_forward(x, params, *, num_classes, temperature):
    w1, b1 = params["w1"], params["b1"]                       # (nc,10,C), (nc,1,10)
    gamma = jnp.sum(jnp.abs(w1), axis=1)                      # L1 norm over out_features
    alpha = jax.nn.softmax(gamma / temperature, axis=1)       # softmax over concepts
    alpha_norm = alpha / jnp.max(alpha, axis=1, keepdims=True)
    xs = x[None, :, :] * alpha_norm[:, None, :]               # (nc, N, C)
    h = jnp.einsum("cnk,cok->cno", xs, w1) + b1               # (nc, N, 10)
    h = jnp.transpose(h, (1, 0, 2))                           # (N, nc, 10)
    h = jnp.where(h > 0, h, LEAKY_SLOPE * h)
    h = h @ params["w2"].T + params["b2"]                     # (N, nc, 4)
    h = jnp.where(h > 0, h, LEAKY_SLOPE * h)
    h = h @ params["w3"].T + params["b3"]                     # (N, nc, 1)
    return h[..., 0]                                          # (N, nc)


if __name__ == "__main__":
    CONCEPT_SIZE = 10
    NUM_CLASSES = 10
    TAU = 0.6
    N = 32

    key = jax.random.PRNGKey(0)
    k_x, k_p = jax.random.split(key)
    x = jax.random.normal(k_x, (N, CONCEPT_SIZE), jnp.float32)
    params = init_params(k_p, CONCEPT_SIZE, NUM_CLASSES)

    out = label_predictor_forward(x, params, num_classes=NUM_CLASSES, temperature=TAU)
    out = jax.block_until_ready(out)

    ref = jax.block_until_ready(
        reference_forward(x, params, num_classes=NUM_CLASSES, temperature=TAU))
    np.testing.assert_allclose(np.asarray(out), np.asarray(ref), rtol=2e-3, atol=2e-3)

    print("KERNEL_OK")
</pallas_src>

<mosaic_0001>
module attributes {stable_mosaic.version = 11 : i64} {
  func.func @label_predictor_kernel(%arg0: i32, %arg1: memref<32x10xf32, #tpu.memory_space<vmem>>, %arg2: memref<10x100xf32, #tpu.memory_space<vmem>>, %arg3: memref<1x100xf32, #tpu.memory_space<vmem>>, %arg4: memref<100x40xf32, #tpu.memory_space<vmem>>, %arg5: memref<1x40xf32, #tpu.memory_space<vmem>>, %arg6: memref<40x10xf32, #tpu.memory_space<vmem>>, %arg7: memref<1x10xf32, #tpu.memory_space<vmem>>, %arg8: memref<32x10xf32, #tpu.memory_space<vmem>>) attributes {dimension_semantics = [#tpu.dimension_semantics<parallel>], iteration_bounds = array<i64: 1>, scalar_prefetch = 0 : i64, scratch_operands = 0 : i64, tpu.core_type = #tpu.core_type<tc>, window_params = [{transform_indices = @transform_0, window_bounds = array<i64: 32, 10>}, {pipeline_mode = #tpu.pipeline_mode<synchronous>, transform_indices = @transform_1, window_bounds = array<i64: 10, 100>}, {pipeline_mode = #tpu.pipeline_mode<synchronous>, transform_indices = @transform_2, window_bounds = array<i64: 1, 100>}, {pipeline_mode = #tpu.pipeline_mode<synchronous>, transform_indices = @transform_3, window_bounds = array<i64: 100, 40>}, {pipeline_mode = #tpu.pipeline_mode<synchronous>, transform_indices = @transform_4, window_bounds = array<i64: 1, 40>}, {pipeline_mode = #tpu.pipeline_mode<synchronous>, transform_indices = @transform_5, window_bounds = array<i64: 40, 10>}, {pipeline_mode = #tpu.pipeline_mode<synchronous>, transform_indices = @transform_6, window_bounds = array<i64: 1, 10>}, {transform_indices = @transform_7, window_bounds = array<i64: 32, 10>}]} {
    %c0 = arith.constant 0 : index
    %c0_0 = arith.constant 0 : index
    %0 = vector.load %arg2[%c0, %c0_0] : memref<10x100xf32, #tpu.memory_space<vmem>>, vector<10x100xf32>
    %1 = tpu.iota {dimensions = array<i32: 0>} : vector<100x10xi32>
    %2 = tpu.iota {dimensions = array<i32: 1>} : vector<100x10xi32>
    %c10_i32 = arith.constant 10 : i32
    %3 = vector.broadcast %c10_i32 : i32 to vector<100x10xi32>
    %4 = arith.muli %2, %3 : vector<100x10xi32>
    %5 = arith.cmpi sge, %1, %4 : vector<100x10xi32>
    %c1_i32 = arith.constant 1 : i32
    %6 = vector.broadcast %c1_i32 : i32 to vector<100x10xi32>
    %7 = arith.addi %2, %6 : vector<100x10xi32>
    %c10_i32_1 = arith.constant 10 : i32
    %8 = vector.broadcast %c10_i32_1 : i32 to vector<100x10xi32>
    %9 = arith.muli %7, %8 : vector<100x10xi32>
    %10 = arith.cmpi slt, %1, %9 : vector<100x10xi32>
    %11 = arith.andi %5, %10 : vector<100x10xi1>
    %12 = arith.extui %11 : vector<100x10xi1> to vector<100x10xi32>
    %13 = arith.sitofp %12 : vector<100x10xi32> to vector<100x10xf32>
    %14 = tpu.iota {dimensions = array<i32: 0>} : vector<10x100xi32>
    %15 = tpu.iota {dimensions = array<i32: 1>} : vector<10x100xi32>
    %c10_i32_2 = arith.constant 10 : i32
    %16 = vector.broadcast %c10_i32_2 : i32 to vector<10x100xi32>
    %17 = arith.muli %14, %16 : vector<10x100xi32>
    %18 = arith.cmpi sge, %15, %17 : vector<10x100xi32>
    %c1_i32_3 = arith.constant 1 : i32
    %19 = vector.broadcast %c1_i32_3 : i32 to vector<10x100xi32>
    %20 = arith.addi %14, %19 : vector<10x100xi32>
    %c10_i32_4 = arith.constant 10 : i32
    %21 = vector.broadcast %c10_i32_4 : i32 to vector<10x100xi32>
    %22 = arith.muli %20, %21 : vector<10x100xi32>
    %23 = arith.cmpi slt, %15, %22 : vector<10x100xi32>
    %24 = arith.andi %18, %23 : vector<10x100xi1>
    %25 = arith.extui %24 : vector<10x100xi1> to vector<10x100xi32>
    %26 = arith.sitofp %25 : vector<10x100xi32> to vector<10x100xf32>
    %27 = math.absf %0 : vector<10x100xf32>
    %cst = arith.constant dense<0.000000e+00> : vector<10x10xf32>
    %28 = tpu.matmul %27, %13, %cst {dimension_numbers = #tpu.dot_dimension_numbers<[1], [0], [0], [1], [0, 0, 1, 1], [], []>} : vector<10x100xf32>, vector<100x10xf32>, vector<10x10xf32> -> vector<10x10xf32>
    %cst_5 = arith.constant 6.000000e-01 : f32
    %29 = vector.broadcast %cst_5 : f32 to vector<10x10xf32>
    %30 = arith.divf %28, %29 : vector<10x10xf32>
    %cst_6 = arith.constant dense<0xFF800000> : vector<10xf32>
    %31 = vector.multi_reduction <maximumf>, %30, %cst_6 [0] : vector<10x10xf32> to vector<10xf32>
    %32 = vector.shape_cast %31 : vector<10xf32> to vector<1x10xf32>
    %33 = vector.broadcast %32 : vector<1x10xf32> to vector<10x10xf32>
    %34 = arith.subf %30, %33 : vector<10x10xf32>
    %35 = math.exp %34 : vector<10x10xf32>
    %cst_7 = arith.constant dense<0.000000e+00> : vector<10xf32>
    %36 = vector.multi_reduction <add>, %35, %cst_7 [0] : vector<10x10xf32> to vector<10xf32>
    %37 = vector.shape_cast %36 : vector<10xf32> to vector<1x10xf32>
    %38 = vector.broadcast %37 : vector<1x10xf32> to vector<10x10xf32>
    %39 = arith.divf %35, %38 : vector<10x10xf32>
    %cst_8 = arith.constant dense<0xFF800000> : vector<10xf32>
    %40 = vector.multi_reduction <maximumf>, %39, %cst_8 [0] : vector<10x10xf32> to vector<10xf32>
    %41 = vector.shape_cast %40 : vector<10xf32> to vector<1x10xf32>
    %42 = vector.broadcast %41 : vector<1x10xf32> to vector<10x10xf32>
    %43 = arith.divf %39, %42 : vector<10x10xf32>
    %cst_9 = arith.constant dense<0.000000e+00> : vector<10x100xf32>
    %44 = tpu.matmul %43, %26, %cst_9 {dimension_numbers = #tpu.dot_dimension_numbers<[1], [0], [0], [1], [0, 0, 1, 1], [], []>} : vector<10x10xf32>, vector<10x100xf32>, vector<10x100xf32> -> vector<10x100xf32>
    %45 = arith.mulf %44, %0 : vector<10x100xf32>
    %c0_10 = arith.constant 0 : index
    %c0_11 = arith.constant 0 : index
    %46 = vector.load %arg1[%c0_10, %c0_11] : memref<32x10xf32, #tpu.memory_space<vmem>>, vector<32x10xf32>
    %cst_12 = arith.constant dense<0.000000e+00> : vector<32x100xf32>
    %47 = tpu.matmul %46, %45, %cst_12 {dimension_numbers = #tpu.dot_dimension_numbers<[1], [0], [0], [1], [0, 0, 1, 1], [], []>} : vector<32x10xf32>, vector<10x100xf32>, vector<32x100xf32> -> vector<32x100xf32>
    %c0_13 = arith.constant 0 : index
    %c0_14 = arith.constant 0 : index
    %48 = vector.load %arg3[%c0_13, %c0_14] : memref<1x100xf32, #tpu.memory_space<vmem>>, vector<1x100xf32>
    %49 = vector.broadcast %48 : vector<1x100xf32> to vector<32x100xf32>
    %50 = arith.addf %47, %49 : vector<32x100xf32>
    %cst_15 = arith.constant 0.000000e+00 : f32
    %51 = vector.broadcast %cst_15 : f32 to vector<32x100xf32>
    %52 = arith.cmpf ogt, %50, %51 : vector<32x100xf32>
    %cst_16 = arith.constant 0.00999999977 : f32
    %53 = vector.broadcast %cst_16 : f32 to vector<32x100xf32>
    %54 = arith.mulf %53, %50 : vector<32x100xf32>
    %55 = arith.select %52, %50, %54 : vector<32x100xi1>, vector<32x100xf32>
    %c0_17 = arith.constant 0 : index
    %c0_18 = arith.constant 0 : index
    %56 = vector.load %arg4[%c0_17, %c0_18] : memref<100x40xf32, #tpu.memory_space<vmem>>, vector<100x40xf32>
    %cst_19 = arith.constant dense<0.000000e+00> : vector<32x40xf32>
    %57 = tpu.matmul %55, %56, %cst_19 {dimension_numbers = #tpu.dot_dimension_numbers<[1], [0], [0], [1], [0, 0, 1, 1], [], []>} : vector<32x100xf32>, vector<100x40xf32>, vector<32x40xf32> -> vector<32x40xf32>
    %c0_20 = arith.constant 0 : index
    %c0_21 = arith.constant 0 : index
    %58 = vector.load %arg5[%c0_20, %c0_21] : memref<1x40xf32, #tpu.memory_space<vmem>>, vector<1x40xf32>
    %59 = vector.broadcast %58 : vector<1x40xf32> to vector<32x40xf32>
    %60 = arith.addf %57, %59 : vector<32x40xf32>
    %cst_22 = arith.constant 0.000000e+00 : f32
    %61 = vector.broadcast %cst_22 : f32 to vector<32x40xf32>
    %62 = arith.cmpf ogt, %60, %61 : vector<32x40xf32>
    %cst_23 = arith.constant 0.00999999977 : f32
    %63 = vector.broadcast %cst_23 : f32 to vector<32x40xf32>
    %64 = arith.mulf %63, %60 : vector<32x40xf32>
    %65 = arith.select %62, %60, %64 : vector<32x40xi1>, vector<32x40xf32>
    %c0_24 = arith.constant 0 : index
    %c0_25 = arith.constant 0 : index
    %66 = vector.load %arg6[%c0_24, %c0_25] : memref<40x10xf32, #tpu.memory_space<vmem>>, vector<40x10xf32>
    %cst_26 = arith.constant dense<0.000000e+00> : vector<32x10xf32>
    %67 = tpu.matmul %65, %66, %cst_26 {dimension_numbers = #tpu.dot_dimension_numbers<[1], [0], [0], [1], [0, 0, 1, 1], [], []>} : vector<32x40xf32>, vector<40x10xf32>, vector<32x10xf32> -> vector<32x10xf32>
    %c0_27 = arith.constant 0 : index
    %c0_28 = arith.constant 0 : index
    %68 = vector.load %arg7[%c0_27, %c0_28] : memref<1x10xf32, #tpu.memory_space<vmem>>, vector<1x10xf32>
    %69 = vector.broadcast %68 : vector<1x10xf32> to vector<32x10xf32>
    %70 = arith.addf %67, %69 : vector<32x10xf32>
    %c0_29 = arith.constant 0 : index
    %c0_30 = arith.constant 0 : index
    %71 = vector.load %arg8[%c0_29, %c0_30] : memref<32x10xf32, #tpu.memory_space<vmem>>, vector<32x10xf32>
    tpu.vector_store %arg8[%c0_29, %c0_30], %70 {strides = array<i32>} : memref<32x10xf32, #tpu.memory_space<vmem>>, vector<32x10xf32>,
    return
  }
  func.func @transform_0(%arg0: i32) -> (i32, i32) {
    %c0_i32 = arith.constant 0 : i32
    %c0_i32_0 = arith.constant 0 : i32
    return %arg0, %c0_i32 : i32, i32
  }
  func.func @transform_1(%arg0: i32) -> (i32, i32) {
    %c0_i32 = arith.constant 0 : i32
    %c0_i32_0 = arith.constant 0 : i32
    %c0_i32_1 = arith.constant 0 : i32
    return %c0_i32, %c0_i32_0 : i32, i32
  }
  func.func @transform_2(%arg0: i32) -> (i32, i32) {
    %c0_i32 = arith.constant 0 : i32
    %c0_i32_0 = arith.constant 0 : i32
    %c0_i32_1 = arith.constant 0 : i32
    return %c0_i32, %c0_i32_0 : i32, i32
  }
  func.func @transform_3(%arg0: i32) -> (i32, i32) {
    %c0_i32 = arith.constant 0 : i32
    %c0_i32_0 = arith.constant 0 : i32
    %c0_i32_1 = arith.constant 0 : i32
    return %c0_i32, %c0_i32_0 : i32, i32
  }
  func.func @transform_4(%arg0: i32) -> (i32, i32) {
    %c0_i32 = arith.constant 0 : i32
    %c0_i32_0 = arith.constant 0 : i32
    %c0_i32_1 = arith.constant 0 : i32
    return %c0_i32, %c0_i32_0 : i32, i32
  }
  func.func @transform_5(%arg0: i32) -> (i32, i32) {
    %c0_i32 = arith.constant 0 : i32
    %c0_i32_0 = arith.constant 0 : i32
    %c0_i32_1 = arith.constant 0 : i32
    return %c0_i32, %c0_i32_0 : i32, i32
  }
  func.func @transform_6(%arg0: i32) -> (i32, i32) {
    %c0_i32 = arith.constant 0 : i32
    %c0_i32_0 = arith.constant 0 : i32
    %c0_i32_1 = arith.constant 0 : i32
    return %c0_i32, %c0_i32_0 : i32, i32
  }
  func.func @transform_7(%arg0: i32) -> (i32, i32) {
    %c0_i32 = arith.constant 0 : i32
    %c0_i32_0 = arith.constant 0 : i32
    return %arg0, %c0_i32 : i32, i32
  }
}

</mosaic_0001>

<llo_original>
// kernel: tpu_custom_call.1
$region0: #{tpu_custom_call.1}
  #allocation0 [shape = 'u32[]', space=smem, size = 0x4, offset = 0x4, fixed_abs, tag = 'smem constant byte address 0x4 - core index']
  #allocation1 [shape = 'u32[144,128]{1,0:T(1,128)}', space=vmem, size = 0x12000, scoped, tag = 'internal scratch']
  %s0 = inlined_call_operand.vmem [shape: f32[32,10], index: 0, kind: input, shape index: {}]
  %s1 = inlined_call_operand.vmem [shape: f32[10,100], index: 1, kind: input, shape index: {}]
  %s2 = inlined_call_operand.vmem [shape: f32[1,100], index: 2, kind: input, shape index: {}]
  %s3 = inlined_call_operand.vmem [shape: f32[100,40], index: 3, kind: input, shape index: {}]
  %s4 = inlined_call_operand.vmem [shape: f32[1,40], index: 4, kind: input, shape index: {}]
  %s5 = inlined_call_operand.vmem [shape: f32[40,10], index: 5, kind: input, shape index: {}]
  %s6 = inlined_call_operand.vmem [shape: f32[1,10], index: 6, kind: input, shape index: {}]
  %s7 = inlined_call_operand.vmem [shape: f32[32,10], index: 7, kind: output, shape index: {}]
  %s8 = sld [smem:[#allocation0]]
  $region38: #{tpu_custom_call.1} parent=0
    _
  %s10 = ssub.s32 1, %s8
  %s11 = scalar_select 0, %s10, %s8
  // Predicated region
  $region2: #{tpu_custom_call.1} parent=0 // pred_check
    _
  $region3: #{tpu_custom_call.1} parent=0 // pred_check_branch
    %13 = sbr.rel (0) target = $region5
  $region4: #{tpu_custom_call.1} parent=0 // pred_region
    _
  $region5: #{tpu_custom_call.1} parent=0 // pred_fallthru
    _
  // Predicated region
  $region6: #{tpu_custom_call.1} parent=0 // pred_check
    _
  $region7: #{tpu_custom_call.1} parent=0 // pred_check_branch
    %15 = sbr.rel (0) target = $region9
  $region8: #{tpu_custom_call.1} parent=0 // pred_region
    _
  $region9: #{tpu_custom_call.1} parent=0 // pred_fallthru
    _
  // Predicated region
  $region10: #{tpu_custom_call.1} parent=0 // pred_check
    _
  $region11: #{tpu_custom_call.1} parent=0 // pred_check_branch
    %17 = sbr.rel (0) target = $region13
  $region12: #{tpu_custom_call.1} parent=0 // pred_region
    _
  $region13: #{tpu_custom_call.1} parent=0 // pred_fallthru
    _
  // Predicated region
  $region14: #{tpu_custom_call.1} parent=0 // pred_check
    _
  $region15: #{tpu_custom_call.1} parent=0 // pred_check_branch
    %19 = sbr.rel (0) target = $region17
  $region16: #{tpu_custom_call.1} parent=0 // pred_region
    _
  $region17: #{tpu_custom_call.1} parent=0 // pred_fallthru
    _
  // Predicated region
  $region18: #{tpu_custom_call.1} parent=0 // pred_check
    _
  $region19: #{tpu_custom_call.1} parent=0 // pred_check_branch
    %21 = sbr.rel (0) target = $region21
  $region20: #{tpu_custom_call.1} parent=0 // pred_region
    _
  $region21: #{tpu_custom_call.1} parent=0 // pred_fallthru
    _
  // Predicated region
  $region22: #{tpu_custom_call.1} parent=0 // pred_check
    _
  $region23: #{tpu_custom_call.1} parent=0 // pred_check_branch
    %23 = sbr.rel (0) target = $region25
  $region24: #{tpu_custom_call.1} parent=0 // pred_region
    _
  $region25: #{tpu_custom_call.1} parent=0 // pred_fallthru
    _
  // Predicated region
  $region26: #{tpu_custom_call.1} parent=0 // pred_check
    _
  $region27: #{tpu_custom_call.1} parent=0 // pred_check_branch
    %25 = sbr.rel (0) target = $region29
  $region28: #{tpu_custom_call.1} parent=0 // pred_region
    _
  $region29: #{tpu_custom_call.1} parent=0 // pred_fallthru
    _
  %v26 = vld [vmem:[%s1] sm:$0xff]
  %v27 = vld [vmem:[%s1 + $0x8] sm:$0x3]
  %v28 = vlaneseq
  %v29 = vshrl.u32 %v28, 7
  %v30 = vadd.s32 %v29, 8
  %v31 = vadd.s32 %v29, 16
  %v32 = vadd.s32 %v29, 24
  %v33 = vadd.s32 %v29, 32
  %v34 = vadd.s32 %v29, 40
  %v35 = vadd.s32 %v29, 48
  %v36 = vadd.s32 %v29, 56
  %v37 = vadd.s32 %v29, 64
  %v38 = vadd.s32 %v29, 72
  %v39 = vadd.s32 %v29, 80
  %v40 = vadd.s32 %v29, 88
  %v41 = vadd.s32 %v29, 96
  %v42 = vlaneseq
  %v43 = vand.u32 %v42, 127
  %v44 = vmul.u32 %v43, 10
  %vm45 = vcmp.ge.s32.totalorder %v29, %v44
  %vm46 = vcmp.ge.s32.totalorder %v30, %v44
  %vm47 = vcmp.ge.s32.totalorder %v31, %v44
  %vm48 = vcmp.ge.s32.totalorder %v32, %v44
  %vm49 = vcmp.ge.s32.totalorder %v33, %v44
  %vm50 = vcmp.ge.s32.totalorder %v34, %v44
  %vm51 = vcmp.ge.s32.totalorder %v35, %v44
  %vm52 = vcmp.ge.s32.totalorder %v36, %v44
  %vm53 = vcmp.ge.s32.totalorder %v37, %v44
  %vm54 = vcmp.ge.s32.totalorder %v38, %v44
  %vm55 = vcmp.ge.s32.totalorder %v39, %v44
  %vm56 = vcmp.ge.s32.totalorder %v40, %v44
  %vm57 = vcmp.ge.s32.totalorder %v41, %v44
  %v58 = vadd.s32 %v43, 1
  %v59 = vmul.u32 %v58, 10
  %vm60 = vcmp.lt.s32.totalorder %v29, %v59
  %vm61 = vcmp.lt.s32.totalorder %v30, %v59
  %vm62 = vcmp.lt.s32.totalorder %v31, %v59
  %vm63 = vcmp.lt.s32.totalorder %v32, %v59
  %vm64 = vcmp.lt.s32.totalorder %v33, %v59
  %vm65 = vcmp.lt.s32.totalorder %v34, %v59
  %vm66 = vcmp.lt.s32.totalorder %v35, %v59
  %vm67 = vcmp.lt.s32.totalorder %v36, %v59
  %vm68 = vcmp.lt.s32.totalorder %v37, %v59
  %vm69 = vcmp.lt.s32.totalorder %v38, %v59
  %vm70 = vcmp.lt.s32.totalorder %v39, %v59
  %vm71 = vcmp.lt.s32.totalorder %v40, %v59
  %vm72 = vcmp.lt.s32.totalorder %v41, %v59
  %vm73 = vmand %vm45, %vm60
  %vm74 = vmand %vm46, %vm61
  %vm75 = vmand %vm47, %vm62
  %vm76 = vmand %vm48, %vm63
  %vm77 = vmand %vm49, %vm64
  %vm78 = vmand %vm50, %vm65
  %vm79 = vmand %vm51, %vm66
  %vm80 = vmand %vm52, %vm67
  %vm81 = vmand %vm53, %vm68
  %vm82 = vmand %vm54, %vm69
  %vm83 = vmand %vm55, %vm70
  %vm84 = vmand %vm56, %vm71
  %vm85 = vmand %vm57, %vm72
  %v86 = vsel %vm73, 1, 0
  %v87 = vsel %vm74, 1, 0
  %v88 = vsel %vm75, 1, 0
  %v89 = vsel %vm76, 1, 0
  %v90 = vsel %vm77, 1, 0
  %v91 = vsel %vm78, 1, 0
  %v92 = vsel %vm79, 1, 0
  %v93 = vsel %vm80, 1, 0
  %v94 = vsel %vm81, 1, 0
  %v95 = vsel %vm82, 1, 0
  %v96 = vsel %vm83, 1, 0
  %v97 = vsel %vm84, 1, 0
  %v98 = vsel %vm85, 1, 0
  %v99 = vcvt.s32.f32 %v86
  %v100 = vcvt.s32.f32 %v87
  %v101 = vcvt.s32.f32 %v88
  %v102 = vcvt.s32.f32 %v89
  %v103 = vcvt.s32.f32 %v90
  %v104 = vcvt.s32.f32 %v91
  %v105 = vcvt.s32.f32 %v92
  %v106 = vcvt.s32.f32 %v93
  %v107 = vcvt.s32.f32 %v94
  %v108 = vcvt.s32.f32 %v95
  %v109 = vcvt.s32.f32 %v96
  %v110 = vcvt.s32.f32 %v97
  %v111 = vcvt.s32.f32 %v98
  %v112 = vmul.u32 %v29, 10
  %v113 = vmul.u32 %v30, 10
  %vm114 = vcmp.ge.s32.totalorder %v43, %v112
  %vm115 = vcmp.ge.s32.totalorder %v43, %v113
  %v116 = vadd.s32 %v29, 1
  %v117 = vadd.s32 %v30, 1
  %v118 = vmul.u32 %v116, 10
  %v119 = vmul.u32 %v117, 10
  %vm120 = vcmp.lt.s32.totalorder %v43, %v118
  %vm121 = vcmp.lt.s32.totalorder %v43, %v119
  %vm122 = vmand %vm114, %vm120
  %vm123 = vmand %vm115, %vm121
  %v124 = vsel %vm122, 1, 0
  %v125 = vsel %vm123, 1, 0
  %v126 = vcvt.s32.f32 %v124
  %v127 = vcvt.s32.f32 %v125
  %v128 = vand.u32 2147483647, %v26
  %v129 = vand.u32 2147483647, %v27
  %vm130 = vcmask 818176
  %v132 = vsel %vm130, %v128, 0
  %v135 = vsel %vm130, %v129, 0
  %vm137 = vcmask 1043456
  %v139 = vsel %vm137, %v111, 0
  %141 = vmatprep.subr.mxu0 0.0
  %142 = vmatpush1.msra.mxu0 %v99
  %143 = vmatprep.subr.mxu0 0.0
  %144 = vmatpush1.msra.mxu0 %v100
  %145 = vmatprep.subr.mxu0 0.0
  %146 = vmatpush1.msra.mxu0 %v101
  %147 = vmatprep.subr.mxu0 0.0
  %148 = vmatpush1.msra.mxu0 %v102
  %149 = vmatprep.subr.mxu0 0.0
  %150 = vmatpush1.msra.mxu0 %v103
  %151 = vmatprep.subr.mxu0 0.0
  %152 = vmatpush1.msra.mxu0 %v104
  %153 = vmatprep.subr.mxu0 0.0
  %154 = vmatpush1.msra.mxu0 %v105
  %155 = vmatprep.subr.mxu0 0.0
  %156 = vmatpush1.msra.mxu0 %v106
  %157 = vmatprep.subr.mxu0 0.0
  %158 = vmatpush1.msra.mxu0 %v107
  %159 = vmatprep.subr.mxu0 0.0
  %160 = vmatpush1.msra.mxu0 %v108
  %161 = vmatprep.subr.mxu0 0.0
  %162 = vmatpush1.msra.mxu0 %v109
  %163 = vmatprep.subr.mxu0 0.0
  %164 = vmatpush1.msra.mxu0 %v110
  %165 = vmatprep.subr.mxu0 0.0
  %166 = vmatpush1.msra.mxu0 %v139
  %167 = vmatprep.subr.mxu0 0.0
  %168 = vmatpush1.msra.mxu0 0.0
  %169 = vmatprep.subr.mxu0 0.0
  %170 = vmatpush1.msra.mxu0 0.0
  %171 = vmatprep.subr.mxu0 0.0
  %172 = vmatpush1.msra.mxu0 0.0
  %173 = vmatprep.subr.mxu0 0.0
  %174 = vmatpush1.msra.mxu0 0.0
  %175 = vmatprep.subr.mxu0 0.0
  %176 = vmatpush1.msra.mxu0 0.0
  %177 = vmatprep.subr.mxu0 0.0
  %178 = vmatpush1.msra.mxu0 0.0
  %179 = vmatprep.subr.mxu0 0.0
  %180 = vmatpush1.msra.mxu0 0.0
  %181 = vmatprep.subr.mxu0 0.0
  %182 = vmatpush1.msra.mxu0 0.0
  %183 = vmatprep.subr.mxu0 0.0
  %184 = vmatpush1.msra.mxu0 0.0
  %185 = vmatprep.subr.mxu0 0.0
  %186 = vmatpush1.msra.mxu0 0.0
  %187 = vmatprep.subr.mxu0 0.0
  %188 = vmatpush1.msra.mxu0 0.0
  %189 = vmatprep.subr.mxu0 0.0
  %190 = vmatpush1.msra.mxu0 0.0
  %191 = vmatprep.subr.mxu0 0.0
  %192 = vmatpush1.msra.mxu0 0.0
  %193 = vmatprep.subr.mxu0 0.0
  %194 = vmatpush1.msra.mxu0 0.0
  %195 = vmatprep.subr.mxu0 0.0
  %196 = vmatpush1.msra.mxu0 0.0
  %197 = vmatprep.subr.mxu0 0.0
  %198 = vmatpush1.msra.mxu0 0.0
  %199 = vmatprep.subr.mxu0 0.0
  %200 = vmatpush1.msra.mxu0 0.0
  %201 = vmatprep.subr.mxu0 0.0
  %202 = vmatpush1.msra.mxu0 0.0
  %203 = vmatprep.subr.mxu0 0.0
  %204 = vmatpush1.msra.mxu0 0.0
  %205 = vmatprep.mubr.f32.mxu0 0.0
  %206 = vmatmul.mubr.f32.gmra.mrb[0].mxu0 %v132
  %v207 = vpop.f32.mrb[0].mxu0
  %v208 = vadd.f32 0.0, %v207
  %v209 = vpop.f32.mrb[0].mxu0
  %210 = vmatprep.mubr.f32.mxu0 0.0
  %211 = vmatmul.mubr.f32.gmra.mrb[0].mxu0 %v135
  %v212 = vpop.f32.mrb[0].mxu0
  %v213 = vadd.f32 0.0, %v212
  %v214 = vpop.f32.mrb[0].mxu0
  %215 = vdwg.mxu0
  %v216 = vrcp.pop 0.6
  %v217 = vmul.f32 %v208, %v216
  %v218 = vmul.f32 %v213, %v216
  %vm219 = vcmask 80896
  %v220 = vsel %vm219, %v217, -inf
  %vm221 = vcmask 74752
  %v222 = vsel %vm221, %v218, -inf
  %v223 = vmax.f32 %v220, %v222
  %v224 = vrot.slane %v223, 4
  %v225 = vmax.f32 %v223, %v224
  %v226 = vrot.slane %v225, 2
  %v227 = vmax.f32 %v225, %v226
  %v228 = vrot.slane %v227, 1
  %v229 = vmax.f32 %v227, %v228
  %v230 = vsub.f32 %v217, %v229
  %v231 = vsub.f32 %v218, %v229
  %v232 = vmul.f32 %v230, 1.442695
  %v233 = vpow.pop %v232
  %v234 = vmul.f32 %v231, 1.442695
  %v235 = vpow.pop %v234
  %v236 = vsel %vm219, %v233, 0.0
  %v237 = vsel %vm221, %v235, 0.0
  %v238 = vadd.f32 %v236, %v237
  %v239 = vrot.slane %v238, 4
  %v240 = vadd.f32 %v238, %v239
  %v241 = vrot.slane %v240, 2
  %v242 = vadd.f32 %v240, %v241
  %v243 = vrot.slane %v242, 1
  %v244 = vadd.f32 %v242, %v243
  %v245 = vrcp.pop %v244
  %v246 = vmul.f32 %v233, %v245
  %v247 = vmul.f32 %v235, %v245
  %v248 = vsel %vm219, %v246, -inf
  %v249 = vsel %vm221, %v247, -inf
  %v250 = vmax.f32 %v248, %v249
  %v251 = vrot.slane %v250, 4
  %v252 = vmax.f32 %v250, %v251
  %v253 = vrot.slane %v252, 2
  %v254 = vmax.f32 %v252, %v253
  %v255 = vrot.slane %v254, 1
  %v256 = vmax.f32 %v254, %v255
  %v257 = vrcp.pop %v256
  %v258 = vmul.f32 %v246, %v257
  %v259 = vmul.f32 %v247, %v257
  %v261 = vsel %vm219, %v258, 0
  %v264 = vsel %vm219, %v259, 0
  %vm266 = vcmask 1041408
  %v268 = vsel %vm266, %v127, 0
  %270 = vmatprep.subr.mxu0 0.0
  %271 = vmatpush1.msra.mxu0 %v126
  %272 = vmatprep.subr.mxu0 0.0
  %273 = vmatpush1.msra.mxu0 %v268
  %274 = vmatprep.subr.mxu0 0.0
  %275 = vmatpush1.msra.mxu0 0.0
  %276 = vmatprep.subr.mxu0 0.0
  %277 = vmatpush1.msra.mxu0 0.0
  %278 = vmatprep.subr.mxu0 0.0
  %279 = vmatpush1.msra.mxu0 0.0
  %280 = vmatprep.subr.mxu0 0.0
  %281 = vmatpush1.msra.mxu0 0.0
  %282 = vmatprep.subr.mxu0 0.0
  %283 = vmatpush1.msra.mxu0 0.0
  %284 = vmatprep.subr.mxu0 0.0
  %285 = vmatpush1.msra.mxu0 0.0
  %286 = vmatprep.subr.mxu0 0.0
  %287 = vmatpush1.msra.mxu0 0.0
  %288 = vmatprep.subr.mxu0 0.0
  %289 = vmatpush1.msra.mxu0 0.0
  %290 = vmatprep.subr.mxu0 0.0
  %291 = vmatpush1.msra.mxu0 0.0
  %292 = vmatprep.subr.mxu0 0.0
  %293 = vmatpush1.msra.mxu0 0.0
  %294 = vmatprep.subr.mxu0 0.0
  %295 = vmatpush1.msra.mxu0 0.0
  %296 = vmatprep.subr.mxu0 0.0
  %297 = vmatpush1.msra.mxu0 0.0
  %298 = vmatprep.subr.mxu0 0.0
  %299 = vmatpush1.msra.mxu0 0.0
  %300 = vmatprep.subr.mxu0 0.0
  %301 = vmatpush1.msra.mxu0 0.0
  %302 = vmatprep.subr.mxu0 0.0
  %303 = vmatpush1.msra.mxu0 0.0
  %304 = vmatprep.subr.mxu0 0.0
  %305 = vmatpush1.msra.mxu0 0.0
  %306 = vmatprep.subr.mxu0 0.0
  %307 = vmatpush1.msra.mxu0 0.0
  %308 = vmatprep.subr.mxu0 0.0
  %309 = vmatpush1.msra.mxu0 0.0
  %310 = vmatprep.subr.mxu0 0.0
  %311 = vmatpush1.msra.mxu0 0.0
  %312 = vmatprep.subr.mxu0 0.0
  %313 = vmatpush1.msra.mxu0 0.0
  %314 = vmatprep.subr.mxu0 0.0
  %315 = vmatpush1.msra.mxu0 0.0
  %316 = vmatprep.subr.mxu0 0.0
  %317 = vmatpush1.msra.mxu0 0.0
  %318 = vmatprep.subr.mxu0 0.0
  %319 = vmatpush1.msra.mxu0 0.0
  %320 = vmatprep.subr.mxu0 0.0
  %321 = vmatpush1.msra.mxu0 0.0
  %322 = vmatprep.subr.mxu0 0.0
  %323 = vmatpush1.msra.mxu0 0.0
  %324 = vmatprep.subr.mxu0 0.0
  %325 = vmatpush1.msra.mxu0 0.0
  %326 = vmatprep.subr.mxu0 0.0
  %327 = vmatpush1.msra.mxu0 0.0
  %328 = vmatprep.subr.mxu0 0.0
  %329 = vmatpush1.msra.mxu0 0.0
  %330 = vmatprep.subr.mxu0 0.0
  %331 = vmatpush1.msra.mxu0 0.0
  %332 = vmatprep.subr.mxu0 0.0
  %333 = vmatpush1.msra.mxu0 0.0
  %334 = vmatprep.mubr.f32.mxu0 0.0
  %335 = vmatmul.mubr.f32.gmra.mrb[0].mxu0 %v261
  %v336 = vpop.f32.mrb[0].mxu0
  %v337 = vadd.f32 0.0, %v336
  %v338 = vpop.f32.mrb[0].mxu0
  %339 = vmatprep.mubr.f32.mxu0 0.0
  %340 = vmatmul.mubr.f32.gmra.mrb[0].mxu0 %v264
  %v341 = vpop.f32.mrb[0].mxu0
  %v342 = vadd.f32 0.0, %v341
  %v343 = vpop.f32.mrb[0].mxu0
  %344 = vdwg.mxu0
  %v345 = vmul.f32 %v337, %v26
  %v346 = vmul.f32 %v342, %v27
  %v347 = vld [vmem:[%s0] sm:$0xff]
  %v348 = vld [vmem:[%s0 + $0x8] sm:$0xff]
  %v349 = vld [vmem:[%s0 + $0x10] sm:$0xff]
  %v350 = vld [vmem:[%s0 + $0x18] sm:$0xff]
  %v351 = vld [vmem:[%s2] sm:$0x1]
  %v353 = vlaneseq
  %v354 = vshrl.u32 %v353, 7
  %v355 = vsub.s32 0, %v354
  %v356 = vrot.slane %v351, %v355
  %v359 = vsel %vm219, %v347, 0
  %v362 = vsel %vm219, %v348, 0
  %v365 = vsel %vm219, %v349, 0
  %v368 = vsel %vm219, %v350, 0
  %v371 = vsel %vm266, %v346, 0
  %373 = vmatprep.subr.mxu0 0.0
  %374 = vmatpush1.msra.mxu0 %v345
  %375 = vmatprep.subr.mxu0 0.0
  %376 = vmatpush1.msra.mxu0 %v371
  %377 = vmatprep.subr.mxu0 0.0
  %378 = vmatpush1.msra.mxu0 0.0
  %379 = vmatprep.subr.mxu0 0.0
  %380 = vmatpush1.msra.mxu0 0.0
  %381 = vmatprep.subr.mxu0 0.0
  %382 = vmatpush1.msra.mxu0 0.0
  %383 = vmatprep.subr.mxu0 0.0
  %384 = vmatpush1.msra.mxu0 0.0
  %385 = vmatprep.subr.mxu0 0.0
  %386 = vmatpush1.msra.mxu0 0.0
  %387 = vmatprep.subr.mxu0 0.0
  %388 = vmatpush1.msra.mxu0 0.0
  %389 = vmatprep.subr.mxu0 0.0
  %390 = vmatpush1.msra.mxu0 0.0
  %391 = vmatprep.subr.mxu0 0.0
  %392 = vmatpush1.msra.mxu0 0.0
  %393 = vmatprep.subr.mxu0 0.0
  %394 = vmatpush1.msra.mxu0 0.0
  %395 = vmatprep.subr.mxu0 0.0
  %396 = vmatpush1.msra.mxu0 0.0
  %397 = vmatprep.subr.mxu0 0.0
  %398 = vmatpush1.msra.mxu0 0.0
  %399 = vmatprep.subr.mxu0 0.0
  %400 = vmatpush1.msra.mxu0 0.0
  %401 = vmatprep.subr.mxu0 0.0
  %402 = vmatpush1.msra.mxu0 0.0
  %403 = vmatprep.subr.mxu0 0.0
  %404 = vmatpush1.msra.mxu0 0.0
  %405 = vmatprep.subr.mxu0 0.0
  %406 = vmatpush1.msra.mxu0 0.0
  %407 = vmatprep.subr.mxu0 0.0
  %408 = vmatpush1.msra.mxu0 0.0
  %409 = vmatprep.subr.mxu0 0.0
  %410 = vmatpush1.msra.mxu0 0.0
  %411 = vmatprep.subr.mxu0 0.0
  %412 = vmatpush1.msra.mxu0 0.0
  %413 = vmatprep.subr.mxu0 0.0
  %414 = vmatpush1.msra.mxu0 0.0
  %415 = vmatprep.subr.mxu0 0.0
  %416 = vmatpush1.msra.mxu0 0.0
  %417 = vmatprep.subr.mxu0 0.0
  %418 = vmatpush1.msra.mxu0 0.0
  %419 = vmatprep.subr.mxu0 0.0
  %420 = vmatpush1.msra.mxu0 0.0
  %421 = vmatprep.subr.mxu0 0.0
  %422 = vmatpush1.msra.mxu0 0.0
  %423 = vmatprep.subr.mxu0 0.0
  %424 = vmatpush1.msra.mxu0 0.0
  %425 = vmatprep.subr.mxu0 0.0
  %426 = vmatpush1.msra.mxu0 0.0
  %427 = vmatprep.subr.mxu0 0.0
  %428 = vmatpush1.msra.mxu0 0.0
  %429 = vmatprep.subr.mxu0 0.0
  %430 = vmatpush1.msra.mxu0 0.0
  %431 = vmatprep.subr.mxu0 0.0
  %432 = vmatpush1.msra.mxu0 0.0
  %433 = vmatprep.subr.mxu0 0.0
  %434 = vmatpush1.msra.mxu0 0.0
  %435 = vmatprep.subr.mxu0 0.0
  %436 = vmatpush1.msra.mxu0 0.0
  %437 = vmatprep.mubr.f32.mxu0 0.0
  %438 = vmatmul.mubr.f32.gmra.mrb[0].mxu0 %v359
  %v439 = vpop.f32.mrb[0].mxu0
  %v440 = vadd.f32 %v356, %v439
  %v441 = vpop.f32.mrb[0].mxu0
  %442 = vmatprep.mubr.f32.mxu0 0.0
  %443 = vmatmul.mubr.f32.gmra.mrb[0].mxu0 %v362
  %v444 = vpop.f32.mrb[0].mxu0
  %v445 = vadd.f32 %v356, %v444
  %v446 = vpop.f32.mrb[0].mxu0
  %447 = vmatprep.mubr.f32.mxu0 0.0
  %448 = vmatmul.mubr.f32.gmra.mrb[0].mxu0 %v365
  %v449 = vpop.f32.mrb[0].mxu0
  %v450 = vadd.f32 %v356, %v449
  %v451 = vpop.f32.mrb[0].mxu0
  %452 = vmatprep.mubr.f32.mxu0 0.0
  %453 = vmatmul.mubr.f32.gmra.mrb[0].mxu0 %v368
  %v454 = vpop.f32.mrb[0].mxu0
  %v455 = vadd.f32 %v356, %v454
  %v456 = vpop.f32.mrb[0].mxu0
  %457 = vdwg.mxu0
  %vm458 = vcmp.gt.f32.partialorder %v440, 0.0
  %vm459 = vcmp.gt.f32.partialorder %v445, 0.0
  %vm460 = vcmp.gt.f32.partialorder %v450, 0.0
  %vm461 = vcmp.gt.f32.partialorder %v455, 0.0
  %v462 = vmul.f32 %v440, 0.01
  %v463 = vmul.f32 %v445, 0.01
  %v464 = vmul.f32 %v450, 0.01
  %v465 = vmul.f32 %v455, 0.01
  %v466 = vsel %vm458, %v440, %v462
  %v467 = vsel %vm459, %v445, %v463
  %v468 = vsel %vm460, %v450, %v464
  %v469 = vsel %vm461, %v455, %v465
  %v470 = vld [vmem:[%s3] sm:$0xff]
  %v471 = vld [vmem:[%s3 + $0x8] sm:$0xff]
  %v472 = vld [vmem:[%s3 + $0x10] sm:$0xff]
  %v473 = vld [vmem:[%s3 + $0x18] sm:$0xff]
  %v474 = vld [vmem:[%s3 + $0x20] sm:$0xff]
  %v475 = vld [vmem:[%s3 + $0x28] sm:$0xff]
  %v476 = vld [vmem:[%s3 + $0x30] sm:$0xff]
  %v477 = vld [vmem:[%s3 + $0x38] sm:$0xff]
  %v478 = vld [vmem:[%s3 + $0x40] sm:$0xff]
  %v479 = vld [vmem:[%s3 + $0x48] sm:$0xff]
  %v480 = vld [vmem:[%s3 + $0x50] sm:$0xff]
  %v481 = vld [vmem:[%s3 + $0x58] sm:$0xff]
  %v482 = vld [vmem:[%s3 + $0x60] sm:$0xf]
  %v483 = vld [vmem:[%s4] sm:$0x1]
  %v485 = vlaneseq
  %v486 = vshrl.u32 %v485, 7
  %v487 = vsub.s32 0, %v486
  %v488 = vrot.slane %v483, %v487
  %v491 = vsel %vm130, %v466, 0
  %v494 = vsel %vm130, %v467, 0
  %v497 = vsel %vm130, %v468, 0
  %v500 = vsel %vm130, %v469, 0
  %v503 = vsel %vm137, %v482, 0
  %505 = vmatprep.subr.mxu0 0.0
  %506 = vmatpush1.msra.mxu0 %v470
  %507 = vmatprep.subr.mxu0 0.0
  %508 = vmatpush1.msra.mxu0 %v471
  %509 = vmatprep.subr.mxu0 0.0
  %510 = vmatpush1.msra.mxu0 %v472
  %511 = vmatprep.subr.mxu0 0.0
  %512 = vmatpush1.msra.mxu0 %v473
  %513 = vmatprep.subr.mxu0 0.0
  %514 = vmatpush1.msra.mxu0 %v474
  %515 = vmatprep.subr.mxu0 0.0
  %516 = vmatpush1.msra.mxu0 %v475
  %517 = vmatprep.subr.mxu0 0.0
  %518 = vmatpush1.msra.mxu0 %v476
  %519 = vmatprep.subr.mxu0 0.0
  %520 = vmatpush1.msra.mxu0 %v477
  %521 = vmatprep.subr.mxu0 0.0
  %522 = vmatpush1.msra.mxu0 %v478
  %523 = vmatprep.subr.mxu0 0.0
  %524 = vmatpush1.msra.mxu0 %v479
  %525 = vmatprep.subr.mxu0 0.0
  %526 = vmatpush1.msra.mxu0 %v480
  %527 = vmatprep.subr.mxu0 0.0
  %528 = vmatpush1.msra.mxu0 %v481
  %529 = vmatprep.subr.mxu0 0.0
  %530 = vmatpush1.msra.mxu0 %v503
  %531 = vmatprep.subr.mxu0 0.0
  %532 = vmatpush1.msra.mxu0 0.0
  %533 = vmatprep.subr.mxu0 0.0
  %534 = vmatpush1.msra.mxu0 0.0
  %535 = vmatprep.subr.mxu0 0.0
  %536 = vmatpush1.msra.mxu0 0.0
  %537 = vmatprep.subr.mxu0 0.0
  %538 = vmatpush1.msra.mxu0 0.0
  %539 = vmatprep.subr.mxu0 0.0
  %540 = vmatpush1.msra.mxu0 0.0
  %541 = vmatprep.subr.mxu0 0.0
  %542 = vmatpush1.msra.mxu0 0.0
  %543 = vmatprep.subr.mxu0 0.0
  %544 = vmatpush1.msra.mxu0 0.0
  %545 = vmatprep.subr.mxu0 0.0
  %546 = vmatpush1.msra.mxu0 0.0
  %547 = vmatprep.subr.mxu0 0.0
  %548 = vmatpush1.msra.mxu0 0.0
  %549 = vmatprep.subr.mxu0 0.0
  %550 = vmatpush1.msra.mxu0 0.0
  %551 = vmatprep.subr.mxu0 0.0
  %552 = vmatpush1.msra.mxu0 0.0
  %553 = vmatprep.subr.mxu0 0.0
  %554 = vmatpush1.msra.mxu0 0.0
  %555 = vmatprep.subr.mxu0 0.0
  %556 = vmatpush1.msra.mxu0 0.0
  %557 = vmatprep.subr.mxu0 0.0
  %558 = vmatpush1.msra.mxu0 0.0
  %559 = vmatprep.subr.mxu0 0.0
  %560 = vmatpush1.msra.mxu0 0.0
  %561 = vmatprep.subr.mxu0 0.0
  %562 = vmatpush1.msra.mxu0 0.0
  %563 = vmatprep.subr.mxu0 0.0
  %564 = vmatpush1.msra.mxu0 0.0
  %565 = vmatprep.subr.mxu0 0.0
  %566 = vmatpush1.msra.mxu0 0.0
  %567 = vmatprep.subr.mxu0 0.0
  %568 = vmatpush1.msra.mxu0 0.0
  %569 = vmatprep.mubr.f32.mxu0 0.0
  %570 = vmatmul.mubr.f32.gmra.mrb[0].mxu0 %v491
  %v571 = vpop.f32.mrb[0].mxu0
  %v572 = vadd.f32 %v488, %v571
  %v573 = vpop.f32.mrb[0].mxu0
  %574 = vmatprep.mubr.f32.mxu0 0.0
  %575 = vmatmul.mubr.f32.gmra.mrb[0].mxu0 %v494
  %v576 = vpop.f32.mrb[0].mxu0
  %v577 = vadd.f32 %v488, %v576
  %v578 = vpop.f32.mrb[0].mxu0
  %579 = vmatprep.mubr.f32.mxu0 0.0
  %580 = vmatmul.mubr.f32.gmra.mrb[0].mxu0 %v497
  %v581 = vpop.f32.mrb[0].mxu0
  %v582 = vadd.f32 %v488, %v581
  %v583 = vpop.f32.mrb[0].mxu0
  %584 = vmatprep.mubr.f32.mxu0 0.0
  %585 = vmatmul.mubr.f32.gmra.mrb[0].mxu0 %v500
  %v586 = vpop.f32.mrb[0].mxu0
  %v587 = vadd.f32 %v488, %v586
  %v588 = vpop.f32.mrb[0].mxu0
  %589 = vdwg.mxu0
  %vm590 = vcmp.gt.f32.partialorder %v572, 0.0
  %vm591 = vcmp.gt.f32.partialorder %v577, 0.0
  %vm592 = vcmp.gt.f32.partialorder %v582, 0.0
  %vm593 = vcmp.gt.f32.partialorder %v587, 0.0
  %v594 = vmul.f32 %v572, 0.01
  %v595 = vmul.f32 %v577, 0.01
  %v596 = vmul.f32 %v582, 0.01
  %v597 = vmul.f32 %v587, 0.01
  %v598 = vsel %vm590, %v572, %v594
  %v599 = vsel %vm591, %v577, %v595
  %v600 = vsel %vm592, %v582, %v596
  %v601 = vsel %vm593, %v587, %v597
  %v602 = vld [vmem:[%s5] sm:$0xff]
  %v603 = vld [vmem:[%s5 + $0x8] sm:$0xff]
  %v604 = vld [vmem:[%s5 + $0x10] sm:$0xff]
  %v605 = vld [vmem:[%s5 + $0x18] sm:$0xff]
  %v606 = vld [vmem:[%s5 + $0x20] sm:$0xff]
  %v607 = vld [vmem:[%s6] sm:$0x1]
  %v609 = vlaneseq
  %v610 = vshrl.u32 %v609, 7
  %v611 = vsub.s32 0, %v610
  %v612 = vrot.slane %v607, %v611
  %vm614 = vcmask 326656
  %v616 = vsel %vm614, %v598, 0
  %v619 = vsel %vm614, %v599, 0
  %v622 = vsel %vm614, %v600, 0
  %v625 = vsel %vm614, %v601, 0
  %627 = vmatprep.subr.mxu0 0.0
  %628 = vmatpush1.msra.mxu0 %v602
  %629 = vmatprep.subr.mxu0 0.0
  %630 = vmatpush1.msra.mxu0 %v603
  %631 = vmatprep.subr.mxu0 0.0
  %632 = vmatpush1.msra.mxu0 %v604
  %633 = vmatprep.subr.mxu0 0.0
  %634 = vmatpush1.msra.mxu0 %v605
  %635 = vmatprep.subr.mxu0 0.0
  %636 = vmatpush1.msra.mxu0 %v606
  %637 = vmatprep.subr.mxu0 0.0
  %638 = vmatpush1.msra.mxu0 0.0
  %639 = vmatprep.subr.mxu0 0.0
  %640 = vmatpush1.msra.mxu0 0.0
  %641 = vmatprep.subr.mxu0 0.0
  %642 = vmatpush1.msra.mxu0 0.0
  %643 = vmatprep.subr.mxu0 0.0
  %644 = vmatpush1.msra.mxu0 0.0
  %645 = vmatprep.subr.mxu0 0.0
  %646 = vmatpush1.msra.mxu0 0.0
  %647 = vmatprep.subr.mxu0 0.0
  %648 = vmatpush1.msra.mxu0 0.0
  %649 = vmatprep.subr.mxu0 0.0
  %650 = vmatpush1.msra.mxu0 0.0
  %651 = vmatprep.subr.mxu0 0.0
  %652 = vmatpush1.msra.mxu0 0.0
  %653 = vmatprep.subr.mxu0 0.0
  %654 = vmatpush1.msra.mxu0 0.0
  %655 = vmatprep.subr.mxu0 0.0
  %656 = vmatpush1.msra.mxu0 0.0
  %657 = vmatprep.subr.mxu0 0.0
  %658 = vmatpush1.msra.mxu0 0.0
  %659 = vmatprep.subr.mxu0 0.0
  %660 = vmatpush1.msra.mxu0 0.0
  %661 = vmatprep.subr.mxu0 0.0
  %662 = vmatpush1.msra.mxu0 0.0
  %663 = vmatprep.subr.mxu0 0.0
  %664 = vmatpush1.msra.mxu0 0.0
  %665 = vmatprep.subr.mxu0 0.0
  %666 = vmatpush1.msra.mxu0 0.0
  %667 = vmatprep.subr.mxu0 0.0
  %668 = vmatpush1.msra.mxu0 0.0
  %669 = vmatprep.subr.mxu0 0.0
  %670 = vmatpush1.msra.mxu0 0.0
  %671 = vmatprep.subr.mxu0 0.0
  %672 = vmatpush1.msra.mxu0 0.0
  %673 = vmatprep.subr.mxu0 0.0
  %674 = vmatpush1.msra.mxu0 0.0
  %675 = vmatprep.subr.mxu0 0.0
  %676 = vmatpush1.msra.mxu0 0.0
  %677 = vmatprep.subr.mxu0 0.0
  %678 = vmatpush1.msra.mxu0 0.0
  %679 = vmatprep.subr.mxu0 0.0
  %680 = vmatpush1.msra.mxu0 0.0
  %681 = vmatprep.subr.mxu0 0.0
  %682 = vmatpush1.msra.mxu0 0.0
  %683 = vmatprep.subr.mxu0 0.0
  %684 = vmatpush1.msra.mxu0 0.0
  %685 = vmatprep.subr.mxu0 0.0
  %686 = vmatpush1.msra.mxu0 0.0
  %687 = vmatprep.subr.mxu0 0.0
  %688 = vmatpush1.msra.mxu0 0.0
  %689 = vmatprep.subr.mxu0 0.0
  %690 = vmatpush1.msra.mxu0 0.0
  %691 = vmatprep.mubr.f32.mxu0 0.0
  %692 = vmatmul.mubr.f32.gmra.mrb[0].mxu0 %v616
  %v693 = vpop.f32.mrb[0].mxu0
  %v694 = vadd.f32 %v612, %v693
  %v695 = vpop.f32.mrb[0].mxu0
  %696 = vmatprep.mubr.f32.mxu0 0.0
  %697 = vmatmul.mubr.f32.gmra.mrb[0].mxu0 %v619
  %v698 = vpop.f32.mrb[0].mxu0
  %v699 = vadd.f32 %v612, %v698
  %v700 = vpop.f32.mrb[0].mxu0
  %701 = vmatprep.mubr.f32.mxu0 0.0
  %702 = vmatmul.mubr.f32.gmra.mrb[0].mxu0 %v622
  %v703 = vpop.f32.mrb[0].mxu0
  %v704 = vadd.f32 %v612, %v703
  %v705 = vpop.f32.mrb[0].mxu0
  %706 = vmatprep.mubr.f32.mxu0 0.0
  %707 = vmatmul.mubr.f32.gmra.mrb[0].mxu0 %v625
  %v708 = vpop.f32.mrb[0].mxu0
  %v709 = vadd.f32 %v612, %v708
  %v710 = vpop.f32.mrb[0].mxu0
  %711 = vdwg.mxu0
  %712 = vst.msk [vmem:[%s7] sm:$0xff] %vm219, %v694
  %713 = vst.msk [vmem:[%s7 + $0x8] sm:$0xff] %vm219, %v699
  %714 = vst.msk [vmem:[%s7 + $0x10] sm:$0xff] %vm219, %v704
  %715 = vst.msk [vmem:[%s7 + $0x18] sm:$0xff] %vm219, %v709
  // Predicated region
  $region30: #{tpu_custom_call.1} parent=0 // pred_check
    _
  $region31: #{tpu_custom_call.1} parent=0 // pred_check_branch
    %717 = sbr.rel (0) target = $region33
  $region32: #{tpu_custom_call.1} parent=0 // pred_region
    _
  $region33: #{tpu_custom_call.1} parent=0 // pred_fallthru
    _
  // Predicated region
  $region34: #{tpu_custom_call.1} parent=0 // pred_check
    _
  $region35: #{tpu_custom_call.1} parent=0 // pred_check_branch
    %719 = sbr.rel (0) target = $region37
  $region36: #{tpu_custom_call.1} parent=0 // pred_region
    _
  $region37: #{tpu_custom_call.1} parent=0 // pred_fallthru
    _

</llo_original>
